<compile_context>
chip_gen: v6e
topology: v6e:2x2x1
jax: 0.10.0
libtpu: 0.0.40
codegen_flags: <defaults>
</compile_context>

<pallas_src>
import functools

import jax
import jax.numpy as jnp
from jax import lax
from jax.experimental import pallas as pl
from jax.experimental.pallas import tpu as pltpu


_MAX_INFLIGHT_GATHERS = 8   # size of the DMA-semaphore ring for the row gather


def _contrastive_head_kernel(seq_ref,          # SMEM (B,) int32  (scalar prefetch)
                             dec_ref,          # HBM  (B*S, D)    flattened decoder output
                             w1_ref, b1_ref,   # VMEM (D,D), (1,D)
                             w2_ref, b2_ref,   # VMEM (D,O), (1,O)
                             eos_ref,          # out  (B, D) eos_token_embs
                             logits_ref,       # out  (B, O) mlp logits
                             pred_ref,         # out  (B, 1) int32 argmax
                             gather_sems,      # scratch: DMA sems (nsem,)
                             *, batch, seq_len, out_dim):
    B, S, O = batch, seq_len, out_dim
    nsem = gather_sems.shape[0]

    def gather_copy(b):
        # EOS row of batch element b in the flattened [B*S, D] decoder output:
        #   row = b*S + (decoder_seq_len[b] - 1)
        # Clamp defensively so a degenerate seq_len of 0 cannot issue an OOB DMA.
        row = b * S + jnp.maximum(seq_ref[b] - 1, 0)
        return pltpu.make_async_copy(
            dec_ref.at[pl.ds(row, 1), :],      # (1, D) HBM source row
            eos_ref.at[pl.ds(b, 1), :],        # (1, D) slot in the VMEM output
            gather_sems.at[b % nsem])

    # Issue every row-gather DMA up front so they all overlap, then drain.
    @pl.loop(0, B)
    def _issue(b):
        gather_copy(b).start()

    @pl.loop(0, B)
    def _drain(b):
        gather_copy(b).wait()

    # Batched MLP head: Linear(D,D) -> ReLU -> Linear(D,O) over all B EOS rows.
    # NOTE(perf): for realistic shapes (D~1024, contrastive batch >= 128 rows)
    # pass bf16 activations/weights (preferred_element_type stays f32) to halve
    # weight DMA and hit native MXU throughput; kept f32 here for exact
    # reference comparison at toy sizes.
    x = eos_ref[...].astype(jnp.float32)                             # (B, D)
    h = jnp.dot(x, w1_ref[...].astype(jnp.float32),
                preferred_element_type=jnp.float32)                  # (B, D)
    h = jnp.maximum(h + b1_ref[...].astype(jnp.float32), 0.0)        # ReLU
    logits = jnp.dot(h, w2_ref[...].astype(jnp.float32),
                     preferred_element_type=jnp.float32)
    logits = logits + b2_ref[...].astype(jnp.float32)                # (B, O)
    logits_ref[...] = logits.astype(logits_ref.dtype)

    # Fused argmax epilogue (first-max-index semantics == torch.max(x, 1)[1]).
    col = lax.broadcasted_iota(jnp.int32, logits.shape, 1)           # (B, O)
    maxv = jnp.max(logits, axis=1, keepdims=True)                    # (B, 1)
    cand = jnp.where(logits == maxv, col, jnp.full_like(col, O))
    pred_ref[...] = jnp.min(cand, axis=1, keepdims=True).astype(jnp.int32)


def contrastive_head(decoder_output, decoder_seq_len, w1, b1, w2, b2):
    """Pallas implementation of ContrastiveModel's own forward compute.

    Returns (eos_token_embs, logits, pred):
      - training mode of the torch module returns (eos_embs[:pos_nums], logits, ...)
        (the [:pos_nums] slice is a trivial host-side slice of `eos`)
      - eval mode returns pred = argmax(logits, 1)
    """
    B, S, D = decoder_output.shape
    O = w2.shape[1]

    # Same flattening as the torch code: reshape(-1, D) then row-gather.
    dec2d = decoder_output.reshape(B * S, D)
    nsem = min(B, _MAX_INFLIGHT_GATHERS)

    kernel = functools.partial(_contrastive_head_kernel,
                               batch=B, seq_len=S, out_dim=O)

    grid_spec = pltpu.PrefetchScalarGridSpec(
        num_scalar_prefetch=1,          # decoder_seq_len -> SMEM
        grid=(1,),                      # single invocation: gather + batched MLP
        in_specs=[
            # Full decoder output stays in HBM; only (1, D) EOS rows are DMA'd.
            pl.BlockSpec(memory_space=pl.ANY),
            # Weights/biases: whole-array VMEM blocks, fetched once.
            pl.BlockSpec((D, D), lambda i, seq: (0, 0)),
            pl.BlockSpec((1, D), lambda i, seq: (0, 0)),
            pl.BlockSpec((D, O), lambda i, seq: (0, 0)),
            pl.BlockSpec((1, O), lambda i, seq: (0, 0)),
        ],
        out_specs=(
            pl.BlockSpec((B, D), lambda i, seq: (0, 0)),   # eos_token_embs
            pl.BlockSpec((B, O), lambda i, seq: (0, 0)),   # logits
            pl.BlockSpec((B, 1), lambda i, seq: (0, 0)),   # pred (fused argmax)
        ),
        scratch_shapes=[pltpu.SemaphoreType.DMA((nsem,))],
    )

    eos, logits, pred = pl.pallas_call(
        kernel,
        out_shape=(
            jax.ShapeDtypeStruct((B, D), jnp.float32),
            jax.ShapeDtypeStruct((B, O), jnp.float32),
            jax.ShapeDtypeStruct((B, 1), jnp.int32),
        ),
        grid_spec=grid_spec,
        compiler_params=pltpu.CompilerParams(
            dimension_semantics=("arbitrary",),
        ),
    )(decoder_seq_len.astype(jnp.int32), dec2d, w1, b1, w2, b2)

    return eos, logits, pred[:, 0]


if __name__ == "__main__":
    # TODO(synk): the BART encoder/decoder and the tokenizer-driven
    # `cont_data_generater` (host Python + random sampling) are external
    # dependencies; a deterministic synthetic decoder_output stands in for
    # `self.decoder(...).last_hidden_state`.
    B, S, D, O = 2, 16, 32, 4      # batch, decoder seq len, input_dim, output_dim

    key = jax.random.PRNGKey(0)
    k_dec, k_w1, k_b1, k_w2, k_b2 = jax.random.split(key, 5)

    decoder_output = jax.random.normal(k_dec, (B, S, D), dtype=jnp.float32)
    decoder_seq_len = jnp.array([10, 16], dtype=jnp.int32)   # per-example lengths (<= S)

    # MLP parameters (nn.Linear(D,D), nn.Linear(D,O)), stored as (in, out) so
    # the kernel computes x @ W + b.
    w1 = jax.random.normal(k_w1, (D, D), dtype=jnp.float32) * 0.1
    b1 = jax.random.normal(k_b1, (1, D), dtype=jnp.float32) * 0.1
    w2 = jax.random.normal(k_w2, (D, O), dtype=jnp.float32) * 0.1
    b2 = jax.random.normal(k_b2, (1, O), dtype=jnp.float32) * 0.1

    eos, logits, pred = contrastive_head(decoder_output, decoder_seq_len, w1, b1, w2, b2)
    jax.block_until_ready((eos, logits, pred))

    # --- pure-JAX reference (mirrors the torch code) -------------------------
    idx = decoder_seq_len + jnp.arange(0, B * S, S) - 1
    eos_ref_v = decoder_output.reshape(-1, D)[idx, :]
    h_ref = jnp.maximum(eos_ref_v @ w1 + b1, 0.0)
    logits_ref_v = h_ref @ w2 + b2
    pred_ref_v = jnp.argmax(logits_ref_v, axis=1)

    assert jnp.allclose(eos, eos_ref_v, atol=1e-5), "eos gather mismatch"
    assert jnp.allclose(logits, logits_ref_v, atol=1e-5), "mlp logits mismatch"
    assert jnp.array_equal(pred, pred_ref_v.astype(pred.dtype)), "argmax mismatch"

    print("KERNEL_OK")
</pallas_src>

<mosaic_0001>
module attributes {stable_mosaic.version = 11 : i64} {
  func.func @_contrastive_head_kernel(%arg0: i32, %arg1: memref<2xi32, #tpu.memory_space<smem>>, %arg2: memref<32x32xf32, #tpu.memory_space<any>>, %arg3: memref<32x32xf32, #tpu.memory_space<vmem>>, %arg4: memref<1x32xf32, #tpu.memory_space<vmem>>, %arg5: memref<32x4xf32, #tpu.memory_space<vmem>>, %arg6: memref<1x4xf32, #tpu.memory_space<vmem>>, %arg7: memref<2x32xf32, #tpu.memory_space<vmem>>, %arg8: memref<2x4xf32, #tpu.memory_space<vmem>>, %arg9: memref<2x1xi32, #tpu.memory_space<vmem>>, %arg10: memref<2x!tpu.dma_semaphore, #tpu.memory_space<semaphore_mem>>) attributes {dimension_semantics = [#tpu.dimension_semantics<arbitrary>], iteration_bounds = array<i64: 1>, scalar_prefetch = 1 : i64, scratch_operands = 1 : i64, tpu.core_type = #tpu.core_type<tc>, window_params = [{}, {pipeline_mode = #tpu.pipeline_mode<synchronous>, transform_indices = @transform_1, window_bounds = array<i64: 32, 32>}, {pipeline_mode = #tpu.pipeline_mode<synchronous>, transform_indices = @transform_2, window_bounds = array<i64: 1, 32>}, {pipeline_mode = #tpu.pipeline_mode<synchronous>, transform_indices = @transform_3, window_bounds = array<i64: 32, 4>}, {pipeline_mode = #tpu.pipeline_mode<synchronous>, transform_indices = @transform_4, window_bounds = array<i64: 1, 4>}, {pipeline_mode = #tpu.pipeline_mode<synchronous>, transform_indices = @transform_5, window_bounds = array<i64: 2, 32>}, {pipeline_mode = #tpu.pipeline_mode<synchronous>, transform_indices = @transform_6, window_bounds = array<i64: 2, 4>}, {pipeline_mode = #tpu.pipeline_mode<synchronous>, transform_indices = @transform_7, window_bounds = array<i64: 2, 1>}]} {
    %c0_i32 = arith.constant 0 : i32
    %c2_i32 = arith.constant 2 : i32
    %0 = arith.addi %c0_i32, %c2_i32 : i32
    %c1_i32 = arith.constant 1 : i32
    scf.for %arg11 = %c0_i32 to %0 step %c1_i32  : i32 {
      %c1_i32_22 = arith.constant 1 : i32
      %26 = arith.muli %arg11, %c1_i32_22 : i32
      %c0_i32_23 = arith.constant 0 : i32
      %27 = arith.addi %c0_i32_23, %26 : i32
      %c16_i32 = arith.constant 16 : i32
      %28 = arith.muli %27, %c16_i32 : i32
      %29 = arith.index_cast %27 : i32 to index
      %30 = memref.load %arg1[%29] : memref<2xi32, #tpu.memory_space<smem>>
      %c1_i32_24 = arith.constant 1 : i32
      %31 = arith.subi %30, %c1_i32_24 : i32
      %c0_i32_25 = arith.constant 0 : i32
      %32 = arith.maxsi %31, %c0_i32_25 : i32
      %33 = arith.addi %28, %32 : i32
      %c2_i32_26 = arith.constant 2 : i32
      %c0_i32_27 = arith.constant 0 : i32
      %34 = arith.cmpi eq, %c2_i32_26, %c0_i32_27 : i32
      %c1_i32_28 = arith.constant 1 : i32
      %35 = arith.select %34, %c1_i32_28, %c2_i32_26 : i32
      %36 = arith.remsi %27, %35 : i32
      %c0_i32_29 = arith.constant 0 : i32
      %37 = arith.cmpi ne, %36, %c0_i32_29 : i32
      %c0_i32_30 = arith.constant 0 : i32
      %38 = arith.cmpi slt, %36, %c0_i32_30 : i32
      %c0_i32_31 = arith.constant 0 : i32
      %39 = arith.cmpi slt, %35, %c0_i32_31 : i32
      %40 = arith.xori %38, %39 : i1
      %41 = arith.andi %40, %37 : i1
      %42 = arith.addi %36, %35 : i32
      %43 = arith.select %41, %42, %36 : i32
      %c0_i32_32 = arith.constant 0 : i32
      %44 = tpu.memref_slice %arg2[%33, %c0_i32_32] : memref<32x32xf32, #tpu.memory_space<any>> -> memref<1x32xf32, #tpu.memory_space<any>>
      %c0_i32_33 = arith.constant 0 : i32
      %45 = tpu.memref_slice %arg7[%27, %c0_i32_33] : memref<2x32xf32, #tpu.memory_space<vmem>> -> memref<1x32xf32, #tpu.memory_space<vmem>>
      %46 = tpu.memref_slice %arg10[%43] : memref<2x!tpu.dma_semaphore, #tpu.memory_space<semaphore_mem>> -> memref<1x!tpu.dma_semaphore, #tpu.memory_space<semaphore_mem>>
      %47 = tpu.memref_squeeze %46 : memref<1x!tpu.dma_semaphore, #tpu.memory_space<semaphore_mem>> -> memref<!tpu.dma_semaphore, #tpu.memory_space<semaphore_mem>>
      tpu.enqueue_dma source(%44 : memref<1x32xf32, #tpu.memory_space<any>>) target(%45 : memref<1x32xf32, #tpu.memory_space<vmem>>) target_semaphore(%47 : memref<!tpu.dma_semaphore, #tpu.memory_space<semaphore_mem>>)
    }
    %c2_i32_0 = arith.constant 2 : i32
    %c0_i32_1 = arith.constant 0 : i32
    %c2_i32_2 = arith.constant 2 : i32
    %1 = arith.addi %c0_i32_1, %c2_i32_2 : i32
    %c1_i32_3 = arith.constant 1 : i32
    scf.for %arg11 = %c0_i32_1 to %1 step %c1_i32_3  : i32 {
      %c1_i32_22 = arith.constant 1 : i32
      %26 = arith.muli %arg11, %c1_i32_22 : i32
      %c0_i32_23 = arith.constant 0 : i32
      %27 = arith.addi %c0_i32_23, %26 : i32
      %c16_i32 = arith.constant 16 : i32
      %28 = arith.muli %27, %c16_i32 : i32
      %29 = arith.index_cast %27 : i32 to index
      %30 = memref.load %arg1[%29] : memref<2xi32, #tpu.memory_space<smem>>
      %c1_i32_24 = arith.constant 1 : i32
      %31 = arith.subi %30, %c1_i32_24 : i32
      %c0_i32_25 = arith.constant 0 : i32
      %32 = arith.maxsi %31, %c0_i32_25 : i32
      %33 = arith.addi %28, %32 : i32
      %c2_i32_26 = arith.constant 2 : i32
      %c0_i32_27 = arith.constant 0 : i32
      %34 = arith.cmpi eq, %c2_i32_26, %c0_i32_27 : i32
      %c1_i32_28 = arith.constant 1 : i32
      %35 = arith.select %34, %c1_i32_28, %c2_i32_26 : i32
      %36 = arith.remsi %27, %35 : i32
      %c0_i32_29 = arith.constant 0 : i32
      %37 = arith.cmpi ne, %36, %c0_i32_29 : i32
      %c0_i32_30 = arith.constant 0 : i32
      %38 = arith.cmpi slt, %36, %c0_i32_30 : i32
      %c0_i32_31 = arith.constant 0 : i32
      %39 = arith.cmpi slt, %35, %c0_i32_31 : i32
      %40 = arith.xori %38, %39 : i1
      %41 = arith.andi %40, %37 : i1
      %42 = arith.addi %36, %35 : i32
      %43 = arith.select %41, %42, %36 : i32
      %c0_i32_32 = arith.constant 0 : i32
      %44 = tpu.memref_slice %arg2[%33, %c0_i32_32] : memref<32x32xf32, #tpu.memory_space<any>> -> memref<1x32xf32, #tpu.memory_space<any>>
      %c0_i32_33 = arith.constant 0 : i32
      %45 = tpu.memref_slice %arg7[%27, %c0_i32_33] : memref<2x32xf32, #tpu.memory_space<vmem>> -> memref<1x32xf32, #tpu.memory_space<vmem>>
      %46 = tpu.memref_slice %arg10[%43] : memref<2x!tpu.dma_semaphore, #tpu.memory_space<semaphore_mem>> -> memref<1x!tpu.dma_semaphore, #tpu.memory_space<semaphore_mem>>
      %47 = tpu.memref_squeeze %46 : memref<1x!tpu.dma_semaphore, #tpu.memory_space<semaphore_mem>> -> memref<!tpu.dma_semaphore, #tpu.memory_space<semaphore_mem>>
      tpu.wait_dma2 semaphore(%47 : memref<!tpu.dma_semaphore, #tpu.memory_space<semaphore_mem>>) src(%44 : memref<1x32xf32, #tpu.memory_space<any>>) dst(%45 : memref<1x32xf32, #tpu.memory_space<vmem>>)
    }
    %c2_i32_4 = arith.constant 2 : i32
    %c0 = arith.constant 0 : index
    %c0_5 = arith.constant 0 : index
    %2 = vector.load %arg7[%c0, %c0_5] : memref<2x32xf32, #tpu.memory_space<vmem>>, vector<2x32xf32>
    %c0_6 = arith.constant 0 : index
    %c0_7 = arith.constant 0 : index
    %3 = vector.load %arg3[%c0_6, %c0_7] : memref<32x32xf32, #tpu.memory_space<vmem>>, vector<32x32xf32>
    %cst = arith.constant dense<0.000000e+00> : vector<2x32xf32>
    %4 = tpu.matmul %2, %3, %cst {dimension_numbers = #tpu.dot_dimension_numbers<[1], [0], [0], [1], [0, 0, 1, 1], [], []>} : vector<2x32xf32>, vector<32x32xf32>, vector<2x32xf32> -> vector<2x32xf32>
    %c0_8 = arith.constant 0 : index
    %c0_9 = arith.constant 0 : index
    %5 = vector.load %arg4[%c0_8, %c0_9] : memref<1x32xf32, #tpu.memory_space<vmem>>, vector<1x32xf32>
    %6 = vector.broadcast %5 : vector<1x32xf32> to vector<2x32xf32>
    %7 = arith.addf %4, %6 : vector<2x32xf32>
    %cst_10 = arith.constant 0.000000e+00 : f32
    %8 = vector.broadcast %cst_10 : f32 to vector<2x32xf32>
    %9 = arith.maximumf %7, %8 : vector<2x32xf32>
    %c0_11 = arith.constant 0 : index
    %c0_12 = arith.constant 0 : index
    %10 = vector.load %arg5[%c0_11, %c0_12] : memref<32x4xf32, #tpu.memory_space<vmem>>, vector<32x4xf32>
    %cst_13 = arith.constant dense<0.000000e+00> : vector<2x4xf32>
    %11 = tpu.matmul %9, %10, %cst_13 {dimension_numbers = #tpu.dot_dimension_numbers<[1], [0], [0], [1], [0, 0, 1, 1], [], []>} : vector<2x32xf32>, vector<32x4xf32>, vector<2x4xf32> -> vector<2x4xf32>
    %c0_14 = arith.constant 0 : index
    %c0_15 = arith.constant 0 : index
    %12 = vector.load %arg6[%c0_14, %c0_15] : memref<1x4xf32, #tpu.memory_space<vmem>>, vector<1x4xf32>
    %13 = vector.broadcast %12 : vector<1x4xf32> to vector<2x4xf32>
    %14 = arith.addf %11, %13 : vector<2x4xf32>
    %c0_16 = arith.constant 0 : index
    %c0_17 = arith.constant 0 : index
    %15 = vector.load %arg8[%c0_16, %c0_17] : memref<2x4xf32, #tpu.memory_space<vmem>>, vector<2x4xf32>
    tpu.vector_store %arg8[%c0_16, %c0_17], %14 {strides = array<i32>} : memref<2x4xf32, #tpu.memory_space<vmem>>, vector<2x4xf32>,
    %16 = tpu.iota {dimensions = array<i32: 1>} : vector<2x4xi32>
    %cst_18 = arith.constant dense<0xFF800000> : vector<2xf32>
    %17 = vector.multi_reduction <maximumf>, %14, %cst_18 [1] : vector<2x4xf32> to vector<2xf32>
    %18 = vector.shape_cast %17 : vector<2xf32> to vector<2x1xf32>
    %19 = vector.broadcast %18 : vector<2x1xf32> to vector<2x4xf32>
    %20 = arith.cmpf oeq, %14, %19 : vector<2x4xf32>
    %c4_i32 = arith.constant 4 : i32
    %21 = vector.broadcast %c4_i32 : i32 to vector<2x4xi32>
    %22 = arith.select %20, %16, %21 : vector<2x4xi1>, vector<2x4xi32>
    %cst_19 = arith.constant dense<2147483647> : vector<2xi32>
    %23 = vector.multi_reduction <minsi>, %22, %cst_19 [1] : vector<2x4xi32> to vector<2xi32>
    %24 = vector.shape_cast %23 : vector<2xi32> to vector<2x1xi32>
    %c0_20 = arith.constant 0 : index
    %c0_21 = arith.constant 0 : index
    %25 = vector.load %arg9[%c0_20, %c0_21] : memref<2x1xi32, #tpu.memory_space<vmem>>, vector<2x1xi32>
    tpu.vector_store %arg9[%c0_20, %c0_21], %24 {strides = array<i32>} : memref<2x1xi32, #tpu.memory_space<vmem>>, vector<2x1xi32>,
    return
  }
  func.func @transform_1(%arg0: i32, %arg1: memref<2xi32, #tpu.memory_space<smem>>) -> (i32, i32) {
    %c0_i32 = arith.constant 0 : i32
    %c0_i32_0 = arith.constant 0 : i32
    %c0_i32_1 = arith.constant 0 : i32
    return %c0_i32, %c0_i32_0 : i32, i32
  }
  func.func @transform_2(%arg0: i32, %arg1: memref<2xi32, #tpu.memory_space<smem>>) -> (i32, i32) {
    %c0_i32 = arith.constant 0 : i32
    %c0_i32_0 = arith.constant 0 : i32
    %c0_i32_1 = arith.constant 0 : i32
    return %c0_i32, %c0_i32_0 : i32, i32
  }
  func.func @transform_3(%arg0: i32, %arg1: memref<2xi32, #tpu.memory_space<smem>>) -> (i32, i32) {
    %c0_i32 = arith.constant 0 : i32
    %c0_i32_0 = arith.constant 0 : i32
    %c0_i32_1 = arith.constant 0 : i32
    return %c0_i32, %c0_i32_0 : i32, i32
  }
  func.func @transform_4(%arg0: i32, %arg1: memref<2xi32, #tpu.memory_space<smem>>) -> (i32, i32) {
    %c0_i32 = arith.constant 0 : i32
    %c0_i32_0 = arith.constant 0 : i32
    %c0_i32_1 = arith.constant 0 : i32
    return %c0_i32, %c0_i32_0 : i32, i32
  }
  func.func @transform_5(%arg0: i32, %arg1: memref<2xi32, #tpu.memory_space<smem>>) -> (i32, i32) {
    %c0_i32 = arith.constant 0 : i32
    %c0_i32_0 = arith.constant 0 : i32
    %c0_i32_1 = arith.constant 0 : i32
    return %c0_i32, %c0_i32_0 : i32, i32
  }
  func.func @transform_6(%arg0: i32, %arg1: memref<2xi32, #tpu.memory_space<smem>>) -> (i32, i32) {
    %c0_i32 = arith.constant 0 : i32
    %c0_i32_0 = arith.constant 0 : i32
    %c0_i32_1 = arith.constant 0 : i32
    return %c0_i32, %c0_i32_0 : i32, i32
  }
  func.func @transform_7(%arg0: i32, %arg1: memref<2xi32, #tpu.memory_space<smem>>) -> (i32, i32) {
    %c0_i32 = arith.constant 0 : i32
    %c0_i32_0 = arith.constant 0 : i32
    %c0_i32_1 = arith.constant 0 : i32
    return %c0_i32, %c0_i32_0 : i32, i32
  }
}

</mosaic_0001>

<llo_original>
// kernel: tpu_custom_call.1
$region0: #{tpu_custom_call.1}
  #allocation0 [shape = 'u32[]', space=smem, size = 0x4, offset = 0x4, fixed_abs, tag = 'smem constant byte address 0x4 - core index']
  #allocation1 [shape = 'u32[144,128]{1,0:T(1,128)}', space=vmem, size = 0x12000, scoped, tag = 'internal scratch']
  #allocation2 [shape = 's32[2]{0}', space=sflag, size = 0x8, scoped, tag = 'scratch operand']
  #allocation3 [shape = 's32[1]{0}', space=sflag, size = 0x4, scoped, tag = 'scoped memory for tpu_custom_call.1']
  #allocation4 [shape = 'u8[512]{0}', space=smem, size = 0x200, scoped, tag = 'prefetched SMEM operand 0']
  #allocation11 [shape = 's32[]', space=sflag, size = 0x4, offset = 0, fixed_abs, tag = 'sflag constant byte address 0x0 - dummy sync flag']
  %s0 = inlined_call_operand.vmem [shape: s32[2], index: 0, kind: input, shape index: {}]
  %s1 = inlined_call_operand.vmem [shape: f32[32,32], index: 1, kind: input, shape index: {}]
  %s2 = inlined_call_operand.hbm [shape: f32[32,32], index: 2, kind: input, shape index: {}]
  %s3 = inlined_call_operand.vmem [shape: f32[1,32], index: 3, kind: input, shape index: {}]
  %s4 = inlined_call_operand.vmem [shape: f32[32,4], index: 4, kind: input, shape index: {}]
  %s5 = inlined_call_operand.vmem [shape: f32[1,4], index: 5, kind: input, shape index: {}]
  %s6 = inlined_call_operand.hbm [shape: f32[2,32], index: 6, kind: output, shape index: {0}]
  %s7 = inlined_call_operand.hbm [shape: f32[2,4], index: 7, kind: output, shape index: {1}]
  %s8 = inlined_call_operand.vmem [shape: s32[2,1], index: 8, kind: output, shape index: {2}]
  %9 = xla_tuple %s6, %s7, %s8
  %s10 = sld [smem:[#allocation0]]
  $region90: #{tpu_custom_call.1} parent=0
    _
  %s12 = ssub.s32 1, %s10
  %s13 = scalar_select 0, %s12, %s10
  %s14 = sshll.u32 %s0, 4
  %s15 = int_to_ptr.vmem [resolvable:$true] %s14
  %17 = dma.vmem_to_smem %s15, 16, [#allocation4], [#allocation3]
  %18 = dma.done [#allocation3], 16
  %19 = sfence
  $region1: #{tpu_custom_call.1} parent=0
    #allocation5 [shape = 'u8[16384]{0}', space=vmem, size = 0x4000, scoped, tag = 'input window, operand 2, single buffered']
    #allocation6 [shape = 's32[1]{0}', space=sflag, size = 0x4, scoped, tag = 'scoped memory for tpu_custom_call.1']
    #allocation7 [shape = 's32[1]{0}', space=sflag, size = 0x4, scoped, tag = 'scoped memory for tpu_custom_call.1']
    #allocation8 [shape = 'u8[1024]{0}', space=vmem, size = 0x400, scoped, tag = 'output window, operand 0, single buffered']
    #allocation9 [shape = 'u8[1024]{0}', space=vmem, size = 0x400, scoped, tag = 'output window, operand 1, single buffered']
    #allocation10 [shape = 's32[1]{0}', space=sflag, size = 0x4, scoped, tag = 'scoped memory for tpu_custom_call.1']
    %20 = vsyncpa [#allocation6], 0
    %21 = vsyncpa [#allocation7], 0
    %22 = vsyncpa [#allocation10], 0
    // Predicated region
    $region2: #{tpu_custom_call.1} parent=1 // pred_check
      _
    $region3: #{tpu_custom_call.1} parent=1 // pred_check_branch
      %24 = sbr.rel (0) target = $region5
    $region4: #{tpu_custom_call.1} parent=1 // pred_region
      %s26 = ssub.s32 512, 512
      %27 = vsyncadd [#allocation6], %s26
      %s28 = sshll.u32 [#allocation5], 4
      %s29 = int_to_ptr.vmem [resolvable:$true] %s28
      %34 = dma.hbm_to_vmem [thread:$0]  %s2, 512, %s29, [#allocation6], 128, 128, 8
    $region5: #{tpu_custom_call.1} parent=1 // pred_fallthru
      _
    // Predicated region
    $region6: #{tpu_custom_call.1} parent=1 // pred_check
      _
    $region7: #{tpu_custom_call.1} parent=1 // pred_check_branch
      %36 = sbr.rel (0) target = $region9
    $region8: #{tpu_custom_call.1} parent=1 // pred_region
      _
    $region9: #{tpu_custom_call.1} parent=1 // pred_fallthru
      _
    // Predicated region
    $region10: #{tpu_custom_call.1} parent=1 // pred_check
      _
    $region11: #{tpu_custom_call.1} parent=1 // pred_check_branch
      %38 = sbr.rel (0) target = $region13
    $region12: #{tpu_custom_call.1} parent=1 // pred_region
      _
    $region13: #{tpu_custom_call.1} parent=1 // pred_fallthru
      _
    // Predicated region
    $region14: #{tpu_custom_call.1} parent=1 // pred_check
      _
    $region15: #{tpu_custom_call.1} parent=1 // pred_check_branch
      %40 = sbr.rel (0) target = $region17
    $region16: #{tpu_custom_call.1} parent=1 // pred_region
      _
    $region17: #{tpu_custom_call.1} parent=1 // pred_fallthru
      _
    // Predicated region
    $region18: #{tpu_custom_call.1} parent=1 // pred_check
      _
    $region19: #{tpu_custom_call.1} parent=1 // pred_check_branch
      %42 = sbr.rel (0) target = $region21
    $region20: #{tpu_custom_call.1} parent=1 // pred_region
      %43 = dma.done [#allocation6], 512
    $region21: #{tpu_custom_call.1} parent=1 // pred_fallthru
      _
    loop: start=0, step=1, limit=2
    $region22: #{tpu_custom_call.1} parent=1 // loop_pre_header
      _
    $region23: #{tpu_custom_call.1} parent=1 // loop_header
      %s45 = sphi 0, %s49
      %p46 = scmp.ge.s32.totalorder %s45, 2
    $region24: #{tpu_custom_call.1} parent=1 // loop_header_branch
      %48 = sbr.rel (%p46) target = $region28
    $region25: #{tpu_custom_call.1} parent=1 // loop_body
      %s50 = smul.u32 %s45, 16
      %s51 = sld [smem:[#allocation4 + %s45]]
      %s52 = ssub.s32 %s51, 1
      %p53 = scmp.gt.s32.totalorder %s52, 0
      %s54 = scalar_select %p53, %s52, 0
      %s55 = sadd.s32 %s50, %s54
      %p56 = scmp.lt.s32.totalorder %s45, 0
      %s57 = ssub.s32 0, %s45
      %s58 = scalar_select %p56, %s57, %s45
      %s59 = sand.u32 %s58, 1
      %s60 = ssub.s32 0, %s59
      %s61 = scalar_select %p56, %s60, %s59
      %p62 = scmp.ne.s32.totalorder %s61, 0
      %p63 = scmp.lt.s32.totalorder %s61, 0
      %p64 = pnand %p63, %p62
      %p65 = pneg %p64
      %s66 = sadd.s32 %s61, 2
      %s67 = scalar_select %p65, %s66, %s61
      %s68 = scalar_lea.vmem %s1, %s55
      %s69 = scalar_lea.vmem [#allocation8], %s45
      %s70 = scalar_lea.sflag [#allocation2], %s67
      %p72 = scmp.lt.u32.totalorder 1, 8
      %p73 = pneg %p72
      // Predicated region
      $region29: #{tpu_custom_call.1} parent=25 // pred_check
        _
      $region30: #{tpu_custom_call.1} parent=25 // pred_check_branch
        %75 = sbr.rel (%p72) target = $region32
      $region31: #{tpu_custom_call.1} parent=25 // pred_region
        %s91 = sand.u32 1, 7
        %p92 = scmp.eq.s32.totalorder %s91, 0
        %p93 = pneg %p92
        // Predicated region
        $region44: #{tpu_custom_call.1} parent=31 // pred_check
          _
        $region45: #{tpu_custom_call.1} parent=31 // pred_check_branch
          %95 = sbr.rel (%p92) target = $region47
        $region46: #{tpu_custom_call.1} parent=31 // pred_region
          %s96 = sand.u32 1, 7
          %s97 = ssub.s32 1, %s96
          %s98 = scalar_lea.vmem %s68, %s97
          %s99 = ssub.s32 1, %s96
          %s100 = scalar_lea.vmem %s69, %s99 [#allocation8]
          %s101 = sshll.u32 1, %s96
          %s102 = ssub.s32 %s101, 1
          loop: start=0, step=1, limit=1
          $region48: #{tpu_custom_call.1} parent=46 // loop_pre_header
            _
          $region49: #{tpu_custom_call.1} parent=46 // loop_header
            %s104 = sphi 0, %s108
            %p105 = scmp.ge.s32.totalorder %s104, 1
            %s109 = sphi %s98, %s98
            %s110 = sphi %s100, %s100
          $region50: #{tpu_custom_call.1} parent=46 // loop_header_branch
            %107 = sbr.rel (%p105) target = $region54
          $region51: #{tpu_custom_call.1} parent=46 // loop_body
            %v111 = vld [vmem:[%s109] sm:%s102]
            %112 = vst [vmem:[%s110] sm:%s102] %v111
          $region52: #{tpu_custom_call.1} parent=46 // loop_footer
            %s108 = sadd.s32 1, %s104
          $region53: #{tpu_custom_call.1} parent=46 // loop_footer_branch
            %103 = sbr.rel target = $region49
          $region54: #{tpu_custom_call.1} parent=46 // loop_exit
            _
        $region47: #{tpu_custom_call.1} parent=31 // pred_fallthru
          _
      $region32: #{tpu_custom_call.1} parent=25 // pred_fallthru
        _
      // Predicated region
      $region33: #{tpu_custom_call.1} parent=25 // pred_check
        %p76 = pneg %p72
      $region34: #{tpu_custom_call.1} parent=25 // pred_check_branch
        %78 = sbr.rel (%p76) target = $region36
      $region35: #{tpu_custom_call.1} parent=25 // pred_region
        %s79 = sshll.u32 1, 1
        %s80 = ssub.s32 %s79, 1
        loop: start=0, step=1, limit=1
        $region37: #{tpu_custom_call.1} parent=35 // loop_pre_header
          _
        $region38: #{tpu_custom_call.1} parent=35 // loop_header
          %s82 = sphi 0, %s86
          %p83 = scmp.ge.s32.totalorder %s82, 1
          %s87 = sphi %s68, %s68
          %s88 = sphi %s69, %s69
        $region39: #{tpu_custom_call.1} parent=35 // loop_header_branch
          %85 = sbr.rel (%p83) target = $region43
        $region40: #{tpu_custom_call.1} parent=35 // loop_body
          %v89 = vld [vmem:[%s87] sm:%s80]
          %90 = vst [vmem:[%s88] sm:%s80] %v89
        $region41: #{tpu_custom_call.1} parent=35 // loop_footer
          %s86 = sadd.s32 1, %s82
        $region42: #{tpu_custom_call.1} parent=35 // loop_footer_branch
          %81 = sbr.rel target = $region38
        $region43: #{tpu_custom_call.1} parent=35 // loop_exit
          _
      $region36: #{tpu_custom_call.1} parent=25 // pred_fallthru
        _
      // Predicated region
      $region55: #{tpu_custom_call.1} parent=25 // pred_check
        _
      $region56: #{tpu_custom_call.1} parent=25 // pred_check_branch
        %115 = sbr.rel (0) target = $region58
      $region57: #{tpu_custom_call.1} parent=25 // pred_region
        %116 = vsyncadd %s70, 16
      $region58: #{tpu_custom_call.1} parent=25 // pred_fallthru
        _
    $region26: #{tpu_custom_call.1} parent=1 // loop_footer
      %s49 = sadd.s32 1, %s45
    $region27: #{tpu_custom_call.1} parent=1 // loop_footer_branch
      %44 = sbr.rel target = $region23
    $region28: #{tpu_custom_call.1} parent=1 // loop_exit
      _
    loop: start=0, step=1, limit=2
    $region59: #{tpu_custom_call.1} parent=1 // loop_pre_header
      _
    $region60: #{tpu_custom_call.1} parent=1 // loop_header
      %s118 = sphi 0, %s122
      %p119 = scmp.ge.s32.totalorder %s118, 2
    $region61: #{tpu_custom_call.1} parent=1 // loop_header_branch
      %121 = sbr.rel (%p119) target = $region65
    $region62: #{tpu_custom_call.1} parent=1 // loop_body
      %s123 = sld [smem:[#allocation4 + %s118]]
      %p124 = scmp.lt.s32.totalorder %s118, 0
      %s125 = ssub.s32 0, %s118
      %s126 = scalar_select %p124, %s125, %s118
      %s127 = sand.u32 %s126, 1
      %s128 = ssub.s32 0, %s127
      %s129 = scalar_select %p124, %s128, %s127
      %p130 = scmp.ne.s32.totalorder %s129, 0
      %p131 = scmp.lt.s32.totalorder %s129, 0
      %p132 = pnand %p131, %p130
      %p133 = pneg %p132
      %s134 = sadd.s32 %s129, 2
      %s135 = scalar_select %p133, %s134, %s129
      %s136 = scalar_lea.sflag [#allocation2], %s135
      %s137 = smul.u32 1, 1
      %s138 = sshll.u32 %s137, 4
      %139 = dma.done %s136, %s138
    $region63: #{tpu_custom_call.1} parent=1 // loop_footer
      %s122 = sadd.s32 1, %s118
    $region64: #{tpu_custom_call.1} parent=1 // loop_footer_branch
      %117 = sbr.rel target = $region60
    $region65: #{tpu_custom_call.1} parent=1 // loop_exit
      _
    %v140 = vld [vmem:[#allocation8] sm:$0x3]
    %v141 = vld [vmem:[#allocation5] sm:$0xff]
    %v142 = vld [vmem:[#allocation5 + $0x8] sm:$0xff]
    %v143 = vld [vmem:[#allocation5 + $0x10] sm:$0xff]
    %v144 = vld [vmem:[#allocation5 + $0x18] sm:$0xff]
    %v145 = vld [vmem:[%s3] sm:$0x1]
    %v147 = vlaneseq
    %v148 = vshrl.u32 %v147, 7
    %v149 = vsub.s32 0, %v148
    %v150 = vrot.slane %v145, %v149
    %vm152 = vcmask 261120
    %v154 = vsel %vm152, %v140, 0
    %156 = vmatprep.subr.mxu0 0.0
    %157 = vmatpush1.msra.mxu0 0.0
    %158 = vmatprep.subr.mxu0 0.0
    %159 = vmatpush1.msra.mxu0 0.0
    %160 = vmatprep.subr.mxu0 0.0
    %161 = vmatpush1.msra.mxu0 0.0
    %162 = vmatprep.subr.mxu0 0.0
    %163 = vmatpush1.msra.mxu0 0.0
    %164 = vmatprep.subr.mxu0 0.0
    %165 = vmatpush1.msra.mxu0 0.0
    %166 = vmatprep.subr.mxu0 0.0
    %167 = vmatpush1.msra.mxu0 0.0
    %168 = vmatprep.subr.mxu0 0.0
    %169 = vmatpush1.msra.mxu0 0.0
    %170 = vmatprep.subr.mxu0 0.0
    %171 = vmatpush1.msra.mxu0 0.0
    %172 = vmatprep.subr.mxu0 0.0
    %173 = vmatpush1.msra.mxu0 0.0
    %174 = vmatprep.subr.mxu0 0.0
    %175 = vmatpush1.msra.mxu0 0.0
    %176 = vmatprep.subr.mxu0 0.0
    %177 = vmatpush1.msra.mxu0 0.0
    %178 = vmatprep.subr.mxu0 0.0
    %179 = vmatpush1.msra.mxu0 0.0
    %180 = vmatprep.subr.mxu0 0.0
    %181 = vmatpush1.msra.mxu0 %v144
    %182 = vmatprep.subr.mxu0 0.0
    %183 = vmatpush1.msra.mxu0 %v143
    %184 = vmatprep.subr.mxu0 0.0
    %185 = vmatpush1.msra.mxu0 %v142
    %186 = vmatprep.subr.mxu0 0.0
    %187 = vmatpush1.msra.mxu0 %v141
    %188 = vmatprep.subr.mxu0 0.0
    %189 = vmatpush2.msra.mxu0 0.0
    %190 = vmatprep.subr.mxu0 0.0
    %191 = vmatpush2.msra.mxu0 0.0
    %192 = vmatprep.subr.mxu0 0.0
    %193 = vmatpush2.msra.mxu0 0.0
    %194 = vmatprep.subr.mxu0 0.0
    %195 = vmatpush2.msra.mxu0 0.0
    %196 = vmatprep.subr.mxu0 0.0
    %197 = vmatpush2.msra.mxu0 0.0
    %198 = vmatprep.subr.mxu0 0.0
    %199 = vmatpush2.msra.mxu0 0.0
    %200 = vmatprep.subr.mxu0 0.0
    %201 = vmatpush2.msra.mxu0 0.0
    %202 = vmatprep.subr.mxu0 0.0
    %203 = vmatpush2.msra.mxu0 0.0
    %204 = vmatprep.subr.mxu0 0.0
    %205 = vmatpush2.msra.mxu0 0.0
    %206 = vmatprep.subr.mxu0 0.0
    %207 = vmatpush2.msra.mxu0 0.0
    %208 = vmatprep.subr.mxu0 0.0
    %209 = vmatpush2.msra.mxu0 0.0
    %210 = vmatprep.subr.mxu0 0.0
    %211 = vmatpush2.msra.mxu0 0.0
    %212 = vmatprep.subr.mxu0 0.0
    %213 = vmatpush2.msra.mxu0 0.0
    %214 = vmatprep.subr.mxu0 0.0
    %215 = vmatpush2.msra.mxu0 0.0
    %216 = vmatprep.subr.mxu0 0.0
    %217 = vmatpush2.msra.mxu0 0.0
    %218 = vmatprep.subr.mxu0 0.0
    %219 = vmatpush2.msra.mxu0 0.0
    %220 = vmatprep.mubr.f32.mxu0 0.0
    %221 = vmatmul.mubr.f32.gmra.mxu0 %v154
    %v222 = vpop.f32.mrf.mxu0
    %v223 = vadd.f32 %v150, %v222
    %v224 = vpop.f32.mrf.mxu0
    %225 = vdwg.mxu0
    %v226 = vmax.f32 %v223, 0.0
    %v227 = vld [vmem:[%s4] sm:$0xff]
    %v228 = vld [vmem:[%s4 + $0x8] sm:$0xff]
    %v229 = vld [vmem:[%s4 + $0x10] sm:$0xff]
    %v230 = vld [vmem:[%s4 + $0x18] sm:$0xff]
    %v231 = vld [vmem:[%s5] sm:$0x1]
    %v233 = vlaneseq
    %v234 = vshrl.u32 %v233, 7
    %v235 = vsub.s32 0, %v234
    %v236 = vrot.slane %v231, %v235
    %v239 = vsel %vm152, %v226, 0
    %241 = vmatprep.subr.mxu0 0.0
    %242 = vmatpush1.msra.mxu0 0.0
    %243 = vmatprep.subr.mxu0 0.0
    %244 = vmatpush1.msra.mxu0 0.0
    %245 = vmatprep.subr.mxu0 0.0
    %246 = vmatpush1.msra.mxu0 0.0
    %247 = vmatprep.subr.mxu0 0.0
    %248 = vmatpush1.msra.mxu0 0.0
    %249 = vmatprep.subr.mxu0 0.0
    %250 = vmatpush1.msra.mxu0 0.0
    %251 = vmatprep.subr.mxu0 0.0
    %252 = vmatpush1.msra.mxu0 0.0
    %253 = vmatprep.subr.mxu0 0.0
    %254 = vmatpush1.msra.mxu0 0.0
    %255 = vmatprep.subr.mxu0 0.0
    %256 = vmatpush1.msra.mxu0 0.0
    %257 = vmatprep.subr.mxu0 0.0
    %258 = vmatpush1.msra.mxu0 0.0
    %259 = vmatprep.subr.mxu0 0.0
    %260 = vmatpush1.msra.mxu0 0.0
    %261 = vmatprep.subr.mxu0 0.0
    %262 = vmatpush1.msra.mxu0 0.0
    %263 = vmatprep.subr.mxu0 0.0
    %264 = vmatpush1.msra.mxu0 0.0
    %265 = vmatprep.subr.mxu0 0.0
    %266 = vmatpush1.msra.mxu0 %v230
    %267 = vmatprep.subr.mxu0 0.0
    %268 = vmatpush1.msra.mxu0 %v229
    %269 = vmatprep.subr.mxu0 0.0
    %270 = vmatpush1.msra.mxu0 %v228
    %271 = vmatprep.subr.mxu0 0.0
    %272 = vmatpush1.msra.mxu0 %v227
    %273 = vmatprep.subr.mxu0 0.0
    %274 = vmatpush2.msra.mxu0 0.0
    %275 = vmatprep.subr.mxu0 0.0
    %276 = vmatpush2.msra.mxu0 0.0
    %277 = vmatprep.subr.mxu0 0.0
    %278 = vmatpush2.msra.mxu0 0.0
    %279 = vmatprep.subr.mxu0 0.0
    %280 = vmatpush2.msra.mxu0 0.0
    %281 = vmatprep.subr.mxu0 0.0
    %282 = vmatpush2.msra.mxu0 0.0
    %283 = vmatprep.subr.mxu0 0.0
    %284 = vmatpush2.msra.mxu0 0.0
    %285 = vmatprep.subr.mxu0 0.0
    %286 = vmatpush2.msra.mxu0 0.0
    %287 = vmatprep.subr.mxu0 0.0
    %288 = vmatpush2.msra.mxu0 0.0
    %289 = vmatprep.subr.mxu0 0.0
    %290 = vmatpush2.msra.mxu0 0.0
    %291 = vmatprep.subr.mxu0 0.0
    %292 = vmatpush2.msra.mxu0 0.0
    %293 = vmatprep.subr.mxu0 0.0
    %294 = vmatpush2.msra.mxu0 0.0
    %295 = vmatprep.subr.mxu0 0.0
    %296 = vmatpush2.msra.mxu0 0.0
    %297 = vmatprep.subr.mxu0 0.0
    %298 = vmatpush2.msra.mxu0 0.0
    %299 = vmatprep.subr.mxu0 0.0
    %300 = vmatpush2.msra.mxu0 0.0
    %301 = vmatprep.subr.mxu0 0.0
    %302 = vmatpush2.msra.mxu0 0.0
    %303 = vmatprep.subr.mxu0 0.0
    %304 = vmatpush2.msra.mxu0 0.0
    %305 = vmatprep.mubr.f32.mxu0 0.0
    %306 = vmatmul.mubr.f32.gmra.mxu0 %v239
    %v307 = vpop.f32.mrf.mxu0
    %v308 = vadd.f32 %v236, %v307
    %v309 = vpop.f32.mrf.mxu0
    %310 = vdwg.mxu0
    %vm311 = vcmask 25600
    %312 = vst.msk [vmem:[#allocation9] sm:$0x3] %vm311, %v308
    %v313 = vlaneseq
    %v314 = vand.u32 %v313, 127
    %v315 = vsel %vm311, %v308, -inf
    %316 = vmax.xlane.f32.xlu0 %v315
    %v317 = vpop.xlane.xlu0 %316
    %vm318 = vcmp.eq.f32.partialorder %v308, %v317
    %v319 = vsel %vm318, %v314, 4
    %v320 = vsel %vm311, %v319, 2147483647
    %v321 = vand.u32 %v320, 65535
    %v322 = vshra.s32 %v320, 16
    %v323 = vcvt.s32.f32 %v321
    %v324 = vcvt.s32.f32 %v322
    %325 = vmin.xlane.f32.xlu0 %v324
    %v326 = vpop.xlane.xlu0 %325
    %vm327 = vcmp.eq.f32.partialorder %v324, %v326
    %v328 = vsel %vm327, %v323, inf
    %329 = vmin.xlane.f32.xlu0 %v328
    %v330 = vpop.xlane.xlu0 %329
    %v331 = vcvt.f32.s32 %v330
    %v332 = vcvt.f32.s32 %v326
    %v333 = vshll.u32 %v332, 16
    %v334 = vadd.s32 %v333, %v331
    %vm335 = vcmask 1024
    %336 = vst.msk [vmem:[%s8] sm:$0x3] %vm335, %v334
    // Predicated region
    $region66: #{tpu_custom_call.1} parent=1 // pred_check
      _
    $region67: #{tpu_custom_call.1} parent=1 // pred_check_branch
      %338 = sbr.rel (0) target = $region69
    $region68: #{tpu_custom_call.1} parent=1 // pred_region
      %s340 = ssub.s32 32, 32
      %341 = vsyncadd [#allocation7], %s340
      %s343 = sshll.u32 [#allocation8], 4
      %s344 = int_to_ptr.vmem [resolvable:$true] %s343
      %346 = dma.vmem_to_hbm [thread:$0]  %s344, 32, %s6, [#allocation7]
    $region69: #{tpu_custom_call.1} parent=1 // pred_fallthru
      _
    // Predicated region
    $region70: #{tpu_custom_call.1} parent=1 // pred_check
      _
    $region71: #{tpu_custom_call.1} parent=1 // pred_check_branch
      %348 = sbr.rel (0) target = $region73
    $region72: #{tpu_custom_call.1} parent=1 // pred_region
      %s350 = ssub.s32 32, 32
      %351 = vsyncadd [#allocation10], %s350
      %s353 = sshll.u32 [#allocation9], 4
      %s354 = int_to_ptr.vmem [resolvable:$true] %s353
      %356 = dma.vmem_to_hbm [thread:$0]  %s354, 32, %s7, [#allocation10]
    $region73: #{tpu_custom_call.1} parent=1 // pred_fallthru
      _
    // Predicated region
    $region74: #{tpu_custom_call.1} parent=1 // pred_check
      _
    $region75: #{tpu_custom_call.1} parent=1 // pred_check_branch
      %358 = sbr.rel (0) target = $region77
    $region76: #{tpu_custom_call.1} parent=1 // pred_region
      _
    $region77: #{tpu_custom_call.1} parent=1 // pred_fallthru
      _
    // Predicated region
    $region78: #{tpu_custom_call.1} parent=1 // pred_check
      _
    $region79: #{tpu_custom_call.1} parent=1 // pred_check_branch
      %360 = sbr.rel (0) target = $region81
    $region80: #{tpu_custom_call.1} parent=1 // pred_region
      %361 = dma.done [#allocation7], 32
    $region81: #{tpu_custom_call.1} parent=1 // pred_fallthru
      _
    // Predicated region
    $region82: #{tpu_custom_call.1} parent=1 // pred_check
      _
    $region83: #{tpu_custom_call.1} parent=1 // pred_check_branch
      %363 = sbr.rel (0) target = $region85
    $region84: #{tpu_custom_call.1} parent=1 // pred_region
      %364 = dma.done [#allocation10], 32
    $region85: #{tpu_custom_call.1} parent=1 // pred_fallthru
      _
    // Predicated region
    $region86: #{tpu_custom_call.1} parent=1 // pred_check
      _
    $region87: #{tpu_custom_call.1} parent=1 // pred_check_branch
      %366 = sbr.rel (0) target = $region89
    $region88: #{tpu_custom_call.1} parent=1 // pred_region
      _
    $region89: #{tpu_custom_call.1} parent=1 // pred_fallthru
      _
    %367 = vsyncpa [#allocation6], 1
    %368 = vsyncpa [#allocation7], 1
    %369 = vsyncpa [#allocation10], 1
  %370 = vsyncmov [#allocation2]
  %s371 = vpop.sfrf %370
  %p372 = scmp.eq.s32.totalorder %s371, 0
  %p373 = pneg %p372
  %375 = shalt.err (%p373)
  %s376 = scalar_lea.sflag [#allocation2], 1
  %377 = vsyncmov %s376
  %s378 = vpop.sfrf %377
  %p379 = scmp.eq.s32.totalorder %s378, 0
  %p380 = pneg %p379
  %382 = shalt.err (%p380)

</llo_original>
